<compile_context>
chip_gen: v6e
topology: v6e:2x2x1
jax: 0.10.0
libtpu: 0.0.40
codegen_flags: <defaults>
</compile_context>

<pallas_src>
import functools

import jax
import jax.numpy as jnp
from jax.experimental import pallas as pl
from jax.experimental.pallas import tpu as pltpu


def _round_up(x, m):
    return (x + m - 1) // m * m


def _vap_kernel(x_ref, vol_ref, w1t_ref, b1_ref, wht_ref, bh_ref, vslab_ref,
                out_ref, *, logstd_row):
    x = x_ref[...]            # (TB, S)  batch-major input tile
    vol = vol_ref[...]        # (1, TB)  volume, batch along lanes

    # Base-net hidden, computed transposed:
    #   h_t[k, b] = ReLU(sum_s W1[s, k] * x[b, s] + b1[k])
    # Contract the last dim of both operands (flash-attention q@k^T pattern) -> (H, TB).
    h_t = jax.lax.dot_general(
        w1t_ref[...], x,
        dimension_numbers=(((1,), (1,)), ((), ())),
        preferred_element_type=jnp.float32)
    h_t = jnp.maximum(h_t + b1_ref[...], 0.0)                         # (H, TB)

    # Fused heads: rows [0, A) = mean, row A = log_std, rows > A = zero padding.
    heads_t = jnp.dot(wht_ref[...], h_t,
                      preferred_element_type=jnp.float32) + bh_ref[...]   # (P, TB)

    # Volume MLP 1 -> 8 -> 1 (transposed).  Packed slab columns: [wv1, bv1, wv2, (bv2,0..)].
    wv1 = vslab_ref[:, 0:1]        # (8, 1)
    bv1 = vslab_ref[:, 1:2]        # (8, 1)
    wv2 = vslab_ref[:, 2:3]        # (8, 1)
    bv2 = vslab_ref[0:1, 3:4]      # (1, 1)
    hv = jnp.maximum(wv1 * vol + bv1, 0.0)                            # (8, TB)
    vol_eff = jnp.sum(hv * wv2, axis=0, keepdims=True) + bv2          # (1, TB)

    # Add the volume effect to the log_std row only; single lane-dense store.
    row = jax.lax.broadcasted_iota(jnp.int32, heads_t.shape, 0)
    out_ref[...] = heads_t + jnp.where(row == logstd_row, vol_eff, 0.0)


def volume_aware_prediction_net(x, volume, params, *, block_rows=4096):
    """x: (B, S) f32; volume: (B, 1) / (B,) / scalar f32 or None.

    Returns (mean (B, A), log_std (B,)).
    """
    x = jnp.asarray(x, jnp.float32)
    B, S = x.shape
    H = params["w1"].shape[1]
    A = params["wm"].shape[1]
    P = _round_up(A + 1, 8)          # fused head width: A mean cols + 1 log_std col, padded

    # Volume handling (mirrors the optional-volume branch of the PyTorch forward).
    use_volume = volume is not None
    if use_volume:
        volume = jnp.asarray(volume, jnp.float32)
        if volume.ndim == 0:
            volume = jnp.broadcast_to(volume, (B,))
        vol_row = volume.reshape(1, -1)                   # (1, B) -- free reshape
    else:
        vol_row = jnp.zeros((1, B), jnp.float32)

    # Batch tiling: always a multiple of 128 so the output / volume blocks are lane-dense
    # (unmasked vst) and satisfy the (8, 128) rule on every path.
    assert block_rows % 128 == 0
    TB = min(_round_up(B, 128), block_rows)
    B_pad = _round_up(B, TB)
    if B_pad != B:
        x = jnp.pad(x, ((0, B_pad - B), (0, 0)))
        vol_row = jnp.pad(vol_row, ((0, 0), (0, B_pad - B)))

    # ---- one-time parameter layout plumbing (transposed / packed for the kernel) ----
    w1_t = params["w1"].T                                             # (H, S)
    b1_c = params["b1"].T                                             # (H, 1)
    wh_t = jnp.concatenate(
        [params["wm"], params["ws"], jnp.zeros((H, P - A - 1), jnp.float32)],
        axis=1).T                                                     # (P, H)
    bh_c = jnp.concatenate(
        [params["bm"], params["bs"], jnp.zeros((1, P - A - 1), jnp.float32)],
        axis=1).T                                                     # (P, 1)
    vslab = jnp.concatenate(
        [params["wv1"].T, params["bv1"].T, params["wv2"].T,
         jnp.concatenate([params["bv2"], jnp.zeros((7, 1), jnp.float32)], axis=0),
         jnp.zeros((8, 4), jnp.float32)], axis=1)                     # (8, 8)
    if not use_volume:
        vslab = jnp.zeros_like(vslab)                                 # vol_effect == 0

    grid = (B_pad // TB,)
    flops = 2 * B_pad * H * (S + P) + 32 * B_pad
    bytes_accessed = 4 * (B_pad * (S + 1 + P) + H * (S + P + 2) + 64)

    out_t = pl.pallas_call(
        functools.partial(_vap_kernel, logstd_row=A),
        grid=grid,
        in_specs=[
            pl.BlockSpec((TB, S), lambda i: (i, 0)),   # x tile (batch-major)
            pl.BlockSpec((1, TB), lambda i: (0, i)),   # volume row (batch in lanes)
            pl.BlockSpec((H, S), lambda i: (0, 0)),    # W1^T        (resident)
            pl.BlockSpec((H, 1), lambda i: (0, 0)),    # b1 column   (resident)
            pl.BlockSpec((P, H), lambda i: (0, 0)),    # fused head weights^T (resident)
            pl.BlockSpec((P, 1), lambda i: (0, 0)),    # fused head bias column (resident)
            pl.BlockSpec((8, 8), lambda i: (0, 0)),    # packed volume-MLP params (resident)
        ],
        out_specs=pl.BlockSpec((P, TB), lambda i: (0, i)),
        out_shape=jax.ShapeDtypeStruct((P, B_pad), jnp.float32),
        compiler_params=pltpu.CompilerParams(dimension_semantics=("parallel",)),
        cost_estimate=pl.CostEstimate(flops=int(flops), transcendentals=0,
                                      bytes_accessed=int(bytes_accessed)),
    )(x, vol_row, w1_t, b1_c, wh_t, bh_c, vslab)

    mean = out_t[:A, :B].T      # (B, A)  -- wrapper-side layout plumbing
    log_std = out_t[A, :B]      # (B,)
    return mean, log_std


def _reference(x, volume, p):
    # Pure-JAX reference for correctness checking.
    h = jnp.maximum(x @ p["w1"] + p["b1"], 0.0)
    mean = h @ p["wm"] + p["bm"]
    log_std = (h @ p["ws"] + p["bs"])[:, 0]
    hv = jnp.maximum(volume @ p["wv1"] + p["bv1"], 0.0)
    vol_eff = jnp.sum(hv * p["wv2"], axis=-1) + p["bv2"][0, 0]
    return mean, log_std + vol_eff


def _init_params(key, S, H, A):
    ks = jax.random.split(key, 10)
    w = lambda k, shape, s: jax.random.normal(k, shape, jnp.float32) * s
    return {
        # base net (TODO(synk): base_net is a constructor arg in PyTorch; a concrete MLP is used here)
        "w1": w(ks[0], (S, H), 0.1), "b1": w(ks[1], (1, H), 0.01),
        "wm": w(ks[2], (H, A), 0.1), "bm": w(ks[3], (1, A), 0.01),
        "ws": w(ks[4], (H, 1), 0.1), "bs": w(ks[5], (1, 1), 0.01),
        # volume_net: Linear(1,8) -> ReLU -> Linear(8,1), stored as (1,8)/(1,1) rows
        "wv1": w(ks[6], (1, 8), 0.5), "bv1": w(ks[7], (1, 8), 0.1),
        "wv2": w(ks[8], (1, 8), 0.5), "bv2": w(ks[9], (1, 1), 0.1),
    }


if __name__ == "__main__":
    B, S, H, A = 4, 16, 32, 8
    key = jax.random.PRNGKey(0)
    kx, kv, kp = jax.random.split(key, 3)

    x = jax.random.normal(kx, (B, S), jnp.float32)
    volume = jax.nn.softplus(jax.random.normal(kv, (B, 1), jnp.float32))
    params = _init_params(kp, S, H, A)

    mean, log_std = volume_aware_prediction_net(x, volume, params)
    mean = jax.block_until_ready(mean)
    log_std = jax.block_until_ready(log_std)

    mean_ref, log_std_ref = _reference(x, volume, params)
    assert mean.shape == (B, A) and log_std.shape == (B,)
    assert jnp.allclose(mean, mean_ref, atol=2e-5, rtol=2e-5), "mean mismatch"
    assert jnp.allclose(log_std, log_std_ref, atol=2e-5, rtol=2e-5), "log_std mismatch"

    # Larger batch exercising the multi-tile grid + padding path.
    B2 = 300
    x2 = jax.random.normal(kx, (B2, S), jnp.float32)
    volume2 = jax.nn.softplus(jax.random.normal(kv, (B2, 1), jnp.float32))
    mean2, log_std2 = volume_aware_prediction_net(x2, volume2, params, block_rows=128)
    mean2 = jax.block_until_ready(mean2)
    log_std2 = jax.block_until_ready(log_std2)
    m2_ref, l2_ref = _reference(x2, volume2, params)
    assert jnp.allclose(mean2, m2_ref, atol=2e-5, rtol=2e-5), "mean mismatch (large B)"
    assert jnp.allclose(log_std2, l2_ref, atol=2e-5, rtol=2e-5), "log_std mismatch (large B)"

    # No-volume path (volume=None branch of the PyTorch forward).
    mean3, log_std3 = volume_aware_prediction_net(x, None, params)
    mean3 = jax.block_until_ready(mean3)
    log_std3 = jax.block_until_ready(log_std3)
    h_ref = jnp.maximum(x @ params["w1"] + params["b1"], 0.0)
    l3_ref = (h_ref @ params["ws"] + params["bs"])[:, 0]
    assert jnp.allclose(log_std3, l3_ref, atol=2e-5, rtol=2e-5), "log_std mismatch (no volume)"

    print("KERNEL_OK")
</pallas_src>

<mosaic_0001>
module attributes {stable_mosaic.version = 11 : i64} {
  func.func @_vap_kernel(%arg0: i32, %arg1: memref<128x16xf32, #tpu.memory_space<vmem>>, %arg2: memref<1x128xf32, #tpu.memory_space<vmem>>, %arg3: memref<32x16xf32, #tpu.memory_space<vmem>>, %arg4: memref<32x1xf32, #tpu.memory_space<vmem>>, %arg5: memref<16x32xf32, #tpu.memory_space<vmem>>, %arg6: memref<16x1xf32, #tpu.memory_space<vmem>>, %arg7: memref<8x8xf32, #tpu.memory_space<vmem>>, %arg8: memref<16x128xf32, #tpu.memory_space<vmem>>) attributes {dimension_semantics = [#tpu.dimension_semantics<parallel>], iteration_bounds = array<i64: 1>, scalar_prefetch = 0 : i64, scratch_operands = 0 : i64, tpu.core_type = #tpu.core_type<tc>, window_params = [{transform_indices = @transform_0, window_bounds = array<i64: 128, 16>}, {transform_indices = @transform_1, window_bounds = array<i64: 1, 128>}, {pipeline_mode = #tpu.pipeline_mode<synchronous>, transform_indices = @transform_2, window_bounds = array<i64: 32, 16>}, {pipeline_mode = #tpu.pipeline_mode<synchronous>, transform_indices = @transform_3, window_bounds = array<i64: 32, 1>}, {pipeline_mode = #tpu.pipeline_mode<synchronous>, transform_indices = @transform_4, window_bounds = array<i64: 16, 32>}, {pipeline_mode = #tpu.pipeline_mode<synchronous>, transform_indices = @transform_5, window_bounds = array<i64: 16, 1>}, {pipeline_mode = #tpu.pipeline_mode<synchronous>, transform_indices = @transform_6, window_bounds = array<i64: 8, 8>}, {transform_indices = @transform_7, window_bounds = array<i64: 16, 128>}]} {
    %c0 = arith.constant 0 : index
    %c0_0 = arith.constant 0 : index
    %0 = vector.load %arg1[%c0, %c0_0] : memref<128x16xf32, #tpu.memory_space<vmem>>, vector<128x16xf32>
    %c0_1 = arith.constant 0 : index
    %c0_2 = arith.constant 0 : index
    %1 = vector.load %arg2[%c0_1, %c0_2] : memref<1x128xf32, #tpu.memory_space<vmem>>, vector<1x128xf32>
    %c0_3 = arith.constant 0 : index
    %c0_4 = arith.constant 0 : index
    %2 = vector.load %arg3[%c0_3, %c0_4] : memref<32x16xf32, #tpu.memory_space<vmem>>, vector<32x16xf32>
    %cst = arith.constant dense<0.000000e+00> : vector<32x128xf32>
    %3 = tpu.matmul %2, %0, %cst {dimension_numbers = #tpu.dot_dimension_numbers<[1], [1], [0], [0], [0, 0, 1, 0], [], []>} : vector<32x16xf32>, vector<128x16xf32>, vector<32x128xf32> -> vector<32x128xf32>
    %c0_5 = arith.constant 0 : index
    %c0_6 = arith.constant 0 : index
    %4 = vector.load %arg4[%c0_5, %c0_6] : memref<32x1xf32, #tpu.memory_space<vmem>>, vector<32x1xf32>
    %5 = vector.broadcast %4 : vector<32x1xf32> to vector<32x128xf32>
    %6 = arith.addf %3, %5 : vector<32x128xf32>
    %cst_7 = arith.constant 0.000000e+00 : f32
    %7 = vector.broadcast %cst_7 : f32 to vector<32x128xf32>
    %8 = arith.maximumf %6, %7 : vector<32x128xf32>
    %c0_8 = arith.constant 0 : index
    %c0_9 = arith.constant 0 : index
    %9 = vector.load %arg5[%c0_8, %c0_9] : memref<16x32xf32, #tpu.memory_space<vmem>>, vector<16x32xf32>
    %cst_10 = arith.constant dense<0.000000e+00> : vector<16x128xf32>
    %10 = tpu.matmul %9, %8, %cst_10 {dimension_numbers = #tpu.dot_dimension_numbers<[1], [0], [0], [1], [0, 0, 1, 1], [], []>} : vector<16x32xf32>, vector<32x128xf32>, vector<16x128xf32> -> vector<16x128xf32>
    %c0_11 = arith.constant 0 : index
    %c0_12 = arith.constant 0 : index
    %11 = vector.load %arg6[%c0_11, %c0_12] : memref<16x1xf32, #tpu.memory_space<vmem>>, vector<16x1xf32>
    %12 = vector.broadcast %11 : vector<16x1xf32> to vector<16x128xf32>
    %13 = arith.addf %10, %12 : vector<16x128xf32>
    %c0_13 = arith.constant 0 : index
    %c0_14 = arith.constant 0 : index
    %14 = vector.load %arg7[%c0_13, %c0_14] : memref<8x8xf32, #tpu.memory_space<vmem>>, vector<8x1xf32>
    %c0_15 = arith.constant 0 : index
    %c1 = arith.constant 1 : index
    %15 = vector.load %arg7[%c0_15, %c1] : memref<8x8xf32, #tpu.memory_space<vmem>>, vector<8x1xf32>
    %c0_16 = arith.constant 0 : index
    %c2 = arith.constant 2 : index
    %16 = vector.load %arg7[%c0_16, %c2] : memref<8x8xf32, #tpu.memory_space<vmem>>, vector<8x1xf32>
    %c0_17 = arith.constant 0 : index
    %c3 = arith.constant 3 : index
    %17 = vector.load %arg7[%c0_17, %c3] : memref<8x8xf32, #tpu.memory_space<vmem>>, vector<1x1xf32>
    %18 = vector.broadcast %14 : vector<8x1xf32> to vector<8x128xf32>
    %19 = vector.broadcast %1 : vector<1x128xf32> to vector<8x128xf32>
    %20 = arith.mulf %18, %19 : vector<8x128xf32>
    %21 = vector.broadcast %15 : vector<8x1xf32> to vector<8x128xf32>
    %22 = arith.addf %20, %21 : vector<8x128xf32>
    %cst_18 = arith.constant 0.000000e+00 : f32
    %23 = vector.broadcast %cst_18 : f32 to vector<8x128xf32>
    %24 = arith.maximumf %22, %23 : vector<8x128xf32>
    %25 = vector.broadcast %16 : vector<8x1xf32> to vector<8x128xf32>
    %26 = arith.mulf %24, %25 : vector<8x128xf32>
    %cst_19 = arith.constant dense<0.000000e+00> : vector<128xf32>
    %27 = vector.multi_reduction <add>, %26, %cst_19 [0] : vector<8x128xf32> to vector<128xf32>
    %28 = vector.shape_cast %27 : vector<128xf32> to vector<1x128xf32>
    %29 = vector.broadcast %17 : vector<1x1xf32> to vector<1x128xf32>
    %30 = arith.addf %28, %29 : vector<1x128xf32>
    %31 = tpu.iota {dimensions = array<i32: 0>} : vector<16x128xi32>
    %c8_i32 = arith.constant 8 : i32
    %32 = vector.broadcast %c8_i32 : i32 to vector<16x128xi32>
    %33 = arith.cmpi eq, %31, %32 : vector<16x128xi32>
    %cst_20 = arith.constant 0.000000e+00 : f32
    %34 = vector.shape_cast %30 : vector<1x128xf32> to vector<1x128xf32>
    %35 = vector.broadcast %34 : vector<1x128xf32> to vector<16x128xf32>
    %36 = vector.broadcast %cst_20 : f32 to vector<16x128xf32>
    %37 = arith.select %33, %35, %36 : vector<16x128xi1>, vector<16x128xf32>
    %38 = arith.addf %13, %37 : vector<16x128xf32>
    %c0_21 = arith.constant 0 : index
    %c0_22 = arith.constant 0 : index
    %39 = vector.load %arg8[%c0_21, %c0_22] : memref<16x128xf32, #tpu.memory_space<vmem>>, vector<16x128xf32>
    tpu.vector_store %arg8[%c0_21, %c0_22], %38 {strides = array<i32>} : memref<16x128xf32, #tpu.memory_space<vmem>>, vector<16x128xf32>,
    return
  }
  func.func @transform_0(%arg0: i32) -> (i32, i32) {
    %c0_i32 = arith.constant 0 : i32
    %c0_i32_0 = arith.constant 0 : i32
    return %arg0, %c0_i32 : i32, i32
  }
  func.func @transform_1(%arg0: i32) -> (i32, i32) {
    %c0_i32 = arith.constant 0 : i32
    %c0_i32_0 = arith.constant 0 : i32
    return %c0_i32, %arg0 : i32, i32
  }
  func.func @transform_2(%arg0: i32) -> (i32, i32) {
    %c0_i32 = arith.constant 0 : i32
    %c0_i32_0 = arith.constant 0 : i32
    %c0_i32_1 = arith.constant 0 : i32
    return %c0_i32, %c0_i32_0 : i32, i32
  }
  func.func @transform_3(%arg0: i32) -> (i32, i32) {
    %c0_i32 = arith.constant 0 : i32
    %c0_i32_0 = arith.constant 0 : i32
    %c0_i32_1 = arith.constant 0 : i32
    return %c0_i32, %c0_i32_0 : i32, i32
  }
  func.func @transform_4(%arg0: i32) -> (i32, i32) {
    %c0_i32 = arith.constant 0 : i32
    %c0_i32_0 = arith.constant 0 : i32
    %c0_i32_1 = arith.constant 0 : i32
    return %c0_i32, %c0_i32_0 : i32, i32
  }
  func.func @transform_5(%arg0: i32) -> (i32, i32) {
    %c0_i32 = arith.constant 0 : i32
    %c0_i32_0 = arith.constant 0 : i32
    %c0_i32_1 = arith.constant 0 : i32
    return %c0_i32, %c0_i32_0 : i32, i32
  }
  func.func @transform_6(%arg0: i32) -> (i32, i32) {
    %c0_i32 = arith.constant 0 : i32
    %c0_i32_0 = arith.constant 0 : i32
    %c0_i32_1 = arith.constant 0 : i32
    return %c0_i32, %c0_i32_0 : i32, i32
  }
  func.func @transform_7(%arg0: i32) -> (i32, i32) {
    %c0_i32 = arith.constant 0 : i32
    %c0_i32_0 = arith.constant 0 : i32
    return %c0_i32, %arg0 : i32, i32
  }
}

</mosaic_0001>

<llo_original>
// kernel: tpu_custom_call.1
$region0: #{tpu_custom_call.1}
  #allocation0 [shape = 'u32[]', space=smem, size = 0x4, offset = 0x4, fixed_abs, tag = 'smem constant byte address 0x4 - core index']
  #allocation1 [shape = 'u32[144,128]{1,0:T(1,128)}', space=vmem, size = 0x12000, scoped, tag = 'internal scratch']
  %s0 = inlined_call_operand.vmem [shape: f32[128,16], index: 0, kind: input, shape index: {}]
  %s1 = inlined_call_operand.vmem [shape: f32[1,128], index: 1, kind: input, shape index: {}]
  %s2 = inlined_call_operand.vmem [shape: f32[32,16], index: 2, kind: input, shape index: {}]
  %s3 = inlined_call_operand.vmem [shape: f32[32,1], index: 3, kind: input, shape index: {}]
  %s4 = inlined_call_operand.vmem [shape: f32[16,32], index: 4, kind: input, shape index: {}]
  %s5 = inlined_call_operand.vmem [shape: f32[16,1], index: 5, kind: input, shape index: {}]
  %s6 = inlined_call_operand.vmem [shape: f32[8,8], index: 6, kind: input, shape index: {}]
  %s7 = inlined_call_operand.hbm [shape: f32[16,128], index: 7, kind: output, shape index: {}]
  %s8 = sld [smem:[#allocation0]]
  $region38: #{tpu_custom_call.1} parent=0
    _
  %s10 = ssub.s32 1, %s8
  %s11 = scalar_select 0, %s10, %s8
  $region1: #{tpu_custom_call.1} parent=0
    #allocation2 [shape = 'u8[8192]{0}', space=vmem, size = 0x2000, scoped, tag = 'output window, operand 0, single buffered']
    #allocation3 [shape = 's32[1]{0}', space=sflag, size = 0x4, scoped, tag = 'scoped memory for tpu_custom_call.1']
    %12 = vsyncpa [#allocation3], 0
    // Predicated region
    $region2: #{tpu_custom_call.1} parent=1 // pred_check
      _
    $region3: #{tpu_custom_call.1} parent=1 // pred_check_branch
      %14 = sbr.rel (0) target = $region5
    $region4: #{tpu_custom_call.1} parent=1 // pred_region
      _
    $region5: #{tpu_custom_call.1} parent=1 // pred_fallthru
      _
    // Predicated region
    $region6: #{tpu_custom_call.1} parent=1 // pred_check
      _
    $region7: #{tpu_custom_call.1} parent=1 // pred_check_branch
      %16 = sbr.rel (0) target = $region9
    $region8: #{tpu_custom_call.1} parent=1 // pred_region
      _
    $region9: #{tpu_custom_call.1} parent=1 // pred_fallthru
      _
    // Predicated region
    $region10: #{tpu_custom_call.1} parent=1 // pred_check
      _
    $region11: #{tpu_custom_call.1} parent=1 // pred_check_branch
      %18 = sbr.rel (0) target = $region13
    $region12: #{tpu_custom_call.1} parent=1 // pred_region
      _
    $region13: #{tpu_custom_call.1} parent=1 // pred_fallthru
      _
    // Predicated region
    $region14: #{tpu_custom_call.1} parent=1 // pred_check
      _
    $region15: #{tpu_custom_call.1} parent=1 // pred_check_branch
      %20 = sbr.rel (0) target = $region17
    $region16: #{tpu_custom_call.1} parent=1 // pred_region
      _
    $region17: #{tpu_custom_call.1} parent=1 // pred_fallthru
      _
    // Predicated region
    $region18: #{tpu_custom_call.1} parent=1 // pred_check
      _
    $region19: #{tpu_custom_call.1} parent=1 // pred_check_branch
      %22 = sbr.rel (0) target = $region21
    $region20: #{tpu_custom_call.1} parent=1 // pred_region
      _
    $region21: #{tpu_custom_call.1} parent=1 // pred_fallthru
      _
    // Predicated region
    $region22: #{tpu_custom_call.1} parent=1 // pred_check
      _
    $region23: #{tpu_custom_call.1} parent=1 // pred_check_branch
      %24 = sbr.rel (0) target = $region25
    $region24: #{tpu_custom_call.1} parent=1 // pred_region
      _
    $region25: #{tpu_custom_call.1} parent=1 // pred_fallthru
      _
    // Predicated region
    $region26: #{tpu_custom_call.1} parent=1 // pred_check
      _
    $region27: #{tpu_custom_call.1} parent=1 // pred_check_branch
      %26 = sbr.rel (0) target = $region29
    $region28: #{tpu_custom_call.1} parent=1 // pred_region
      _
    $region29: #{tpu_custom_call.1} parent=1 // pred_fallthru
      _
    %v27 = vld [vmem:[%s0] sm:$0xff]
    %v28 = vld [vmem:[%s0 + $0x8] sm:$0xff]
    %v29 = vld [vmem:[%s0 + $0x10] sm:$0xff]
    %v30 = vld [vmem:[%s0 + $0x18] sm:$0xff]
    %v31 = vld [vmem:[%s0 + $0x20] sm:$0xff]
    %v32 = vld [vmem:[%s0 + $0x28] sm:$0xff]
    %v33 = vld [vmem:[%s0 + $0x30] sm:$0xff]
    %v34 = vld [vmem:[%s0 + $0x38] sm:$0xff]
    %v35 = vld [vmem:[%s0 + $0x40] sm:$0xff]
    %v36 = vld [vmem:[%s0 + $0x48] sm:$0xff]
    %v37 = vld [vmem:[%s0 + $0x50] sm:$0xff]
    %v38 = vld [vmem:[%s0 + $0x58] sm:$0xff]
    %v39 = vld [vmem:[%s0 + $0x60] sm:$0xff]
    %v40 = vld [vmem:[%s0 + $0x68] sm:$0xff]
    %v41 = vld [vmem:[%s0 + $0x70] sm:$0xff]
    %v42 = vld [vmem:[%s0 + $0x78] sm:$0xff]
    %v43 = vld [vmem:[%s1] sm:$0x1]
    %v44 = vld [vmem:[%s2] sm:$0xff]
    %v45 = vld [vmem:[%s2 + $0x8] sm:$0xff]
    %v46 = vld [vmem:[%s2 + $0x10] sm:$0xff]
    %v47 = vld [vmem:[%s2 + $0x18] sm:$0xff]
    %v48 = vld [vmem:[%s3] sm:$0xff]
    %v49 = vld [vmem:[%s3 + $0x8] sm:$0xff]
    %v50 = vld [vmem:[%s3 + $0x10] sm:$0xff]
    %v51 = vld [vmem:[%s3 + $0x18] sm:$0xff]
    %53 = vset.pattern.permute.xlu0 0
    %54 = vperm.xlu0 %53, %v48
    %v55 = vpop.permute.xlu0 %54
    %58 = vset.pattern.permute.xlu0 0
    %59 = vperm.xlu0 %58, %v49
    %v60 = vpop.permute.xlu0 %59
    %63 = vset.pattern.permute.xlu0 0
    %64 = vperm.xlu0 %63, %v50
    %v65 = vpop.permute.xlu0 %64
    %68 = vset.pattern.permute.xlu0 0
    %69 = vperm.xlu0 %68, %v51
    %v70 = vpop.permute.xlu0 %69
    %vm72 = vcmask 130048
    %v74 = vsel %vm72, %v44, 0
    %v77 = vsel %vm72, %v45, 0
    %v80 = vsel %vm72, %v46, 0
    %v83 = vsel %vm72, %v47, 0
    %v86 = vsel %vm72, %v27, 0
    %v89 = vsel %vm72, %v28, 0
    %v92 = vsel %vm72, %v29, 0
    %v95 = vsel %vm72, %v30, 0
    %v98 = vsel %vm72, %v31, 0
    %v101 = vsel %vm72, %v32, 0
    %v104 = vsel %vm72, %v33, 0
    %v107 = vsel %vm72, %v34, 0
    %v110 = vsel %vm72, %v35, 0
    %v113 = vsel %vm72, %v36, 0
    %v116 = vsel %vm72, %v37, 0
    %v119 = vsel %vm72, %v38, 0
    %v122 = vsel %vm72, %v39, 0
    %v125 = vsel %vm72, %v40, 0
    %v128 = vsel %vm72, %v41, 0
    %v131 = vsel %vm72, %v42, 0
    %133 = vmatprep.subr.mxu0 0.0
    %134 = vmatpush1.xpose.msra.mxu0 %v131
    %135 = vmatprep.subr.mxu0 0.0
    %136 = vmatpush1.xpose.msra.mxu0 %v128
    %137 = vmatprep.subr.mxu0 0.0
    %138 = vmatpush1.xpose.msra.mxu0 %v125
    %139 = vmatprep.subr.mxu0 0.0
    %140 = vmatpush1.xpose.msra.mxu0 %v122
    %141 = vmatprep.subr.mxu0 0.0
    %142 = vmatpush1.xpose.msra.mxu0 %v119
    %143 = vmatprep.subr.mxu0 0.0
    %144 = vmatpush1.xpose.msra.mxu0 %v116
    %145 = vmatprep.subr.mxu0 0.0
    %146 = vmatpush1.xpose.msra.mxu0 %v113
    %147 = vmatprep.subr.mxu0 0.0
    %148 = vmatpush1.xpose.msra.mxu0 %v110
    %149 = vmatprep.subr.mxu0 0.0
    %150 = vmatpush1.xpose.msra.mxu0 %v107
    %151 = vmatprep.subr.mxu0 0.0
    %152 = vmatpush1.xpose.msra.mxu0 %v104
    %153 = vmatprep.subr.mxu0 0.0
    %154 = vmatpush1.xpose.msra.mxu0 %v101
    %155 = vmatprep.subr.mxu0 0.0
    %156 = vmatpush1.xpose.msra.mxu0 %v98
    %157 = vmatprep.subr.mxu0 0.0
    %158 = vmatpush1.xpose.msra.mxu0 %v95
    %159 = vmatprep.subr.mxu0 0.0
    %160 = vmatpush1.xpose.msra.mxu0 %v92
    %161 = vmatprep.subr.mxu0 0.0
    %162 = vmatpush1.xpose.msra.mxu0 %v89
    %163 = vmatprep.subr.mxu0 0.0
    %164 = vmatpush1.xpose.msra.mxu0 %v86
    %165 = vmatprep.subr.mxu0 0.0
    %166 = vmatpush2.xpose.msra.mxu0 0.0
    %167 = vmatprep.subr.mxu0 0.0
    %168 = vmatpush2.xpose.msra.mxu0 0.0
    %169 = vmatprep.subr.mxu0 0.0
    %170 = vmatpush2.xpose.msra.mxu0 0.0
    %171 = vmatprep.subr.mxu0 0.0
    %172 = vmatpush2.xpose.msra.mxu0 0.0
    %173 = vmatprep.subr.mxu0 0.0
    %174 = vmatpush2.xpose.msra.mxu0 0.0
    %175 = vmatprep.subr.mxu0 0.0
    %176 = vmatpush2.xpose.msra.mxu0 0.0
    %177 = vmatprep.subr.mxu0 0.0
    %178 = vmatpush2.xpose.msra.mxu0 0.0
    %179 = vmatprep.subr.mxu0 0.0
    %180 = vmatpush2.xpose.msra.mxu0 0.0
    %181 = vmatprep.subr.mxu0 0.0
    %182 = vmatpush2.xpose.msra.mxu0 0.0
    %183 = vmatprep.subr.mxu0 0.0
    %184 = vmatpush2.xpose.msra.mxu0 0.0
    %185 = vmatprep.subr.mxu0 0.0
    %186 = vmatpush2.xpose.msra.mxu0 0.0
    %187 = vmatprep.subr.mxu0 0.0
    %188 = vmatpush2.xpose.msra.mxu0 0.0
    %189 = vmatprep.subr.mxu0 0.0
    %190 = vmatpush2.xpose.msra.mxu0 0.0
    %191 = vmatprep.subr.mxu0 0.0
    %192 = vmatpush2.xpose.msra.mxu0 0.0
    %193 = vmatprep.subr.mxu0 0.0
    %194 = vmatpush2.xpose.msra.mxu0 0.0
    %195 = vmatprep.subr.mxu0 0.0
    %196 = vmatpush2.xpose.msra.mxu0 0.0
    %197 = vmatprep.mubr.f32.mxu0 0.0
    %198 = vmatmul.mubr.f32.gmra.mxu0 %v74
    %v199 = vpop.f32.mrf.mxu0
    %v200 = vadd.f32 %v55, %v199
    %v201 = vpop.f32.mrf.mxu0
    %202 = vmatprep.mubr.f32.mxu0 0.0
    %203 = vmatmul.mubr.f32.gmra.mxu0 %v77
    %v204 = vpop.f32.mrf.mxu0
    %v205 = vadd.f32 %v60, %v204
    %v206 = vpop.f32.mrf.mxu0
    %207 = vmatprep.mubr.f32.mxu0 0.0
    %208 = vmatmul.mubr.f32.gmra.mxu0 %v80
    %v209 = vpop.f32.mrf.mxu0
    %v210 = vadd.f32 %v65, %v209
    %v211 = vpop.f32.mrf.mxu0
    %212 = vmatprep.mubr.f32.mxu0 0.0
    %213 = vmatmul.mubr.f32.gmra.mxu0 %v83
    %v214 = vpop.f32.mrf.mxu0
    %v215 = vadd.f32 %v70, %v214
    %v216 = vpop.f32.mrf.mxu0
    %217 = vdwg.mxu0
    %v218 = vmax.f32 %v200, 0.0
    %v219 = vmax.f32 %v205, 0.0
    %v220 = vmax.f32 %v210, 0.0
    %v221 = vmax.f32 %v215, 0.0
    %v222 = vld [vmem:[%s4] sm:$0xff]
    %v223 = vld [vmem:[%s4 + $0x8] sm:$0xff]
    %v224 = vld [vmem:[%s5] sm:$0xff]
    %v225 = vld [vmem:[%s5 + $0x8] sm:$0xff]
    %227 = vset.pattern.permute.xlu0 0
    %228 = vperm.xlu0 %227, %v224
    %v229 = vpop.permute.xlu0 %228
    %232 = vset.pattern.permute.xlu0 0
    %233 = vperm.xlu0 %232, %v225
    %v234 = vpop.permute.xlu0 %233
    %vm236 = vcmask 261120
    %v238 = vsel %vm236, %v222, 0
    %v241 = vsel %vm236, %v223, 0
    %243 = vmatprep.subr.mxu0 0.0
    %244 = vmatpush1.msra.mxu0 0.0
    %245 = vmatprep.subr.mxu0 0.0
    %246 = vmatpush1.msra.mxu0 0.0
    %247 = vmatprep.subr.mxu0 0.0
    %248 = vmatpush1.msra.mxu0 0.0
    %249 = vmatprep.subr.mxu0 0.0
    %250 = vmatpush1.msra.mxu0 0.0
    %251 = vmatprep.subr.mxu0 0.0
    %252 = vmatpush1.msra.mxu0 0.0
    %253 = vmatprep.subr.mxu0 0.0
    %254 = vmatpush1.msra.mxu0 0.0
    %255 = vmatprep.subr.mxu0 0.0
    %256 = vmatpush1.msra.mxu0 0.0
    %257 = vmatprep.subr.mxu0 0.0
    %258 = vmatpush1.msra.mxu0 0.0
    %259 = vmatprep.subr.mxu0 0.0
    %260 = vmatpush1.msra.mxu0 0.0
    %261 = vmatprep.subr.mxu0 0.0
    %262 = vmatpush1.msra.mxu0 0.0
    %263 = vmatprep.subr.mxu0 0.0
    %264 = vmatpush1.msra.mxu0 0.0
    %265 = vmatprep.subr.mxu0 0.0
    %266 = vmatpush1.msra.mxu0 0.0
    %267 = vmatprep.subr.mxu0 0.0
    %268 = vmatpush1.msra.mxu0 %v221
    %269 = vmatprep.subr.mxu0 0.0
    %270 = vmatpush1.msra.mxu0 %v220
    %271 = vmatprep.subr.mxu0 0.0
    %272 = vmatpush1.msra.mxu0 %v219
    %273 = vmatprep.subr.mxu0 0.0
    %274 = vmatpush1.msra.mxu0 %v218
    %275 = vmatprep.subr.mxu0 0.0
    %276 = vmatpush2.msra.mxu0 0.0
    %277 = vmatprep.subr.mxu0 0.0
    %278 = vmatpush2.msra.mxu0 0.0
    %279 = vmatprep.subr.mxu0 0.0
    %280 = vmatpush2.msra.mxu0 0.0
    %281 = vmatprep.subr.mxu0 0.0
    %282 = vmatpush2.msra.mxu0 0.0
    %283 = vmatprep.subr.mxu0 0.0
    %284 = vmatpush2.msra.mxu0 0.0
    %285 = vmatprep.subr.mxu0 0.0
    %286 = vmatpush2.msra.mxu0 0.0
    %287 = vmatprep.subr.mxu0 0.0
    %288 = vmatpush2.msra.mxu0 0.0
    %289 = vmatprep.subr.mxu0 0.0
    %290 = vmatpush2.msra.mxu0 0.0
    %291 = vmatprep.subr.mxu0 0.0
    %292 = vmatpush2.msra.mxu0 0.0
    %293 = vmatprep.subr.mxu0 0.0
    %294 = vmatpush2.msra.mxu0 0.0
    %295 = vmatprep.subr.mxu0 0.0
    %296 = vmatpush2.msra.mxu0 0.0
    %297 = vmatprep.subr.mxu0 0.0
    %298 = vmatpush2.msra.mxu0 0.0
    %299 = vmatprep.subr.mxu0 0.0
    %300 = vmatpush2.msra.mxu0 0.0
    %301 = vmatprep.subr.mxu0 0.0
    %302 = vmatpush2.msra.mxu0 0.0
    %303 = vmatprep.subr.mxu0 0.0
    %304 = vmatpush2.msra.mxu0 0.0
    %305 = vmatprep.subr.mxu0 0.0
    %306 = vmatpush2.msra.mxu0 0.0
    %307 = vmatprep.mubr.f32.mxu0 0.0
    %308 = vmatmul.mubr.f32.gmra.mxu0 %v238
    %v309 = vpop.f32.mrf.mxu0
    %v310 = vadd.f32 %v229, %v309
    %v311 = vpop.f32.mrf.mxu0
    %312 = vmatprep.mubr.f32.mxu0 0.0
    %313 = vmatmul.mubr.f32.gmra.mxu0 %v241
    %v314 = vpop.f32.mrf.mxu0
    %v315 = vadd.f32 %v234, %v314
    %v316 = vpop.f32.mrf.mxu0
    %317 = vdwg.mxu0
    %v318 = vld [vmem:[%s6] sm:$0xff]
    %v319 = vld [vmem:[%s6] sm:$0x1]
    %321 = vset.pattern.permute.xlu0 0
    %322 = vperm.xlu0 %321, %v318
    %v323 = vpop.permute.xlu0 %322
    %v326 = vlaneseq
    %v327 = vshrl.u32 %v326, 7
    %v328 = vsub.s32 0, %v327
    %v329 = vrot.slane %v43, %v328
    %v331 = vmul.f32 %v323, %v329
    %332 = vset.pattern.permute.xlu0 1
    %333 = vperm.xlu0 %332, %v318
    %v334 = vpop.permute.xlu0 %333
    %v336 = vadd.f32 %v331, %v334
    %v337 = vmax.f32 %v336, 0.0
    %338 = vset.pattern.permute.xlu0 2
    %339 = vperm.xlu0 %338, %v318
    %v340 = vpop.permute.xlu0 %339
    %v342 = vmul.f32 %v337, %v340
    %v343 = vrot.slane %v342, 4
    %v344 = vadd.f32 %v342, %v343
    %v345 = vrot.slane %v344, 2
    %v346 = vadd.f32 %v344, %v345
    %v347 = vrot.slane %v346, 1
    %v348 = vadd.f32 %v346, %v347
    %350 = vset.pattern.permute.xlu0 3
    %351 = vperm.xlu0 %350, %v319
    %v352 = vpop.permute.xlu0 %351
    %v354 = vadd.f32 %v348, %v352
    %v355 = vlaneseq
    %v356 = vshrl.u32 %v355, 7
    %v357 = vadd.s32 %v356, 8
    %vm358 = vcmp.eq.s32.totalorder %v356, 8
    %vm359 = vcmp.eq.s32.totalorder %v357, 8
    %v360 = vlaneseq
    %v361 = vshrl.u32 %v360, 7
    %v362 = vsub.s32 0, %v361
    %v363 = vrot.slane %v354, %v362
    %v364 = vsel %vm358, %v363, 0.0
    %v365 = vsel %vm359, %v363, 0.0
    %v366 = vadd.f32 %v310, %v364
    %v367 = vadd.f32 %v315, %v365
    %368 = vst [vmem:[#allocation2] sm:$0xff] %v366
    %369 = vst [vmem:[#allocation2 + $0x8] sm:$0xff] %v367
    // Predicated region
    $region30: #{tpu_custom_call.1} parent=1 // pred_check
      _
    $region31: #{tpu_custom_call.1} parent=1 // pred_check_branch
      %371 = sbr.rel (0) target = $region33
    $region32: #{tpu_custom_call.1} parent=1 // pred_region
      %s373 = ssub.s32 256, 256
      %374 = vsyncadd [#allocation3], %s373
      %s375 = sshll.u32 [#allocation2], 4
      %s376 = int_to_ptr.vmem [resolvable:$true] %s375
      %381 = dma.vmem_to_hbm [thread:$0]  %s376, 256, %s7, [#allocation3], 128, 128, 8
    $region33: #{tpu_custom_call.1} parent=1 // pred_fallthru
      _
    // Predicated region
    $region34: #{tpu_custom_call.1} parent=1 // pred_check
      _
    $region35: #{tpu_custom_call.1} parent=1 // pred_check_branch
      %383 = sbr.rel (0) target = $region37
    $region36: #{tpu_custom_call.1} parent=1 // pred_region
      %384 = dma.done [#allocation3], 256
    $region37: #{tpu_custom_call.1} parent=1 // pred_fallthru
      _
    %385 = vsyncpa [#allocation3], 1

</llo_original>
